<compile_context>
chip_gen: v7x
topology: tpu7x:2x2x1
jax: 0.10.0
libtpu: 0.0.40
codegen_flags: <defaults>
</compile_context>

<pallas_src>
import jax
import jax.numpy as jnp
from jax import lax
from jax.experimental import pallas as pl
from jax.experimental.pallas import tpu as pltpu

LANES = 128
SUBLANES = 8
NCORES = 2                       # leading "parallel" axis (2 TCs on v7x)
TILE_R_MAX = 8192                # 8192*128*4B = 4 MiB per f32 input tile
VMEM_LIMIT_BYTES = 40 * 1024 * 1024


def _round_up(x, m):
    return (x + m - 1) // m * m


def _make_kernel(rows, tile_r, steps_per_core, needs_mask):
    """rows/tile_r/steps_per_core are Python ints; needs_mask a Python bool."""

    def kernel(yhat_ref, y_ref, sum_ref, cnt_ref, acc_loss, acc_cnt):
        c = pl.program_id(0)         # "core" (parallel) axis
        i = pl.program_id(1)         # row-step (reduction / "arbitrary") axis

        @pl.when(i == 0)
        def _():
            acc_loss[...] = jnp.zeros_like(acc_loss)
            acc_cnt[...] = jnp.zeros_like(acc_cnt)

        x = yhat_ref[...].astype(jnp.float32)
        y = y_ref[...].astype(jnp.float32)

        # target = (y + 1) / 2
        t = (y + 1.0) * 0.5
        # BCEWithLogitsLoss (reduction='none'), numerically stable form:
        #   loss = max(x, 0) - x*t + log(1 + exp(-|x|))
        loss = jnp.maximum(x, 0.0) - x * t + jnp.log1p(jnp.exp(-jnp.abs(x)))

        # label 0 marks an invalid element
        isvalid = y != 0.0

        def accumulate(valid):
            # Mask BEFORE accumulation: garbage rows of partial blocks may hold
            # NaN/Inf; jnp.where is a select, so they never reach the sums.
            l = jnp.where(valid, loss, 0.0)
            v = valid.astype(jnp.float32)
            # Full-vreg (8,128) accumulators: sum over the sublane-tile axis only
            # (pure VALU adds); the 8->1 / 128->1 reduce happens in the wrapper.
            acc_loss[...] += jnp.sum(
                l.reshape(tile_r // SUBLANES, SUBLANES, LANES), axis=0)
            acc_cnt[...] += jnp.sum(
                v.reshape(tile_r // SUBLANES, SUBLANES, LANES), axis=0)

        if not needs_mask:
            # Grid coverage == rows exactly: no row mask anywhere.
            accumulate(isvalid)
        else:
            block_start = (c * steps_per_core + i) * tile_r
            is_full = block_start + tile_r <= rows

            @pl.when(is_full)
            def _():
                accumulate(isvalid)               # common path: no iota/mask

            @pl.when(jnp.logical_not(is_full))
            def _():
                row_ids = block_start + lax.broadcasted_iota(
                    jnp.int32, (tile_r, LANES), 0)
                accumulate(jnp.logical_and(isvalid, row_ids < rows))

        @pl.when(i == pl.num_programs(1) - 1)
        def _():
            sum_ref[...] = acc_loss[...]
            cnt_ref[...] = acc_cnt[...]

    return kernel


def multi_classification_loss(yhat, y):
    """Equivalent of MultiClassificationLoss.forward on a {task/pred, task/true} pair."""
    yhat_flat = yhat.reshape(-1)
    y_flat = y.reshape(-1)
    n = yhat_flat.shape[0]

    rows = n // LANES
    rem = n - rows * LANES

    # Ragged tail (< 128 elements): a few plain-JAX ops instead of a full-array pad.
    tail_sum = jnp.float32(0.0)
    tail_cnt = jnp.float32(0.0)
    if rem:
        xt = yhat_flat[rows * LANES:].astype(jnp.float32)
        yt = y_flat[rows * LANES:].astype(jnp.float32)
        tt = (yt + 1.0) * 0.5
        lt = jnp.maximum(xt, 0.0) - xt * tt + jnp.log1p(jnp.exp(-jnp.abs(xt)))
        vt = yt != 0.0
        tail_sum = jnp.sum(jnp.where(vt, lt, 0.0))
        tail_cnt = jnp.sum(vt.astype(jnp.float32))

    if rows == 0:
        # Entire input fits in the tail path.
        return tail_sum / tail_cnt

    if rem:
        yhat_main = yhat_flat[: rows * LANES]
        y_main = y_flat[: rows * LANES]
    else:
        yhat_main = yhat_flat
        y_main = y_flat
    yhat2d = yhat_main.reshape(rows, LANES)
    y2d = y_main.reshape(rows, LANES)

    # Split rows roughly evenly across the NCORES parallel axis; each core then
    # loops over steps_per_core tiles of tile_r rows.
    tile_r = min(TILE_R_MAX, _round_up(pl.cdiv(rows, NCORES), SUBLANES))
    steps_per_core = pl.cdiv(rows, NCORES * tile_r)
    needs_mask = (NCORES * steps_per_core * tile_r) != rows

    # Clamp block indices so padded grid steps never index past the array; their
    # (repeated) data is fully row-masked in-kernel.
    max_block = max(pl.cdiv(rows, tile_r) - 1, 0)

    def in_idx(c, i):
        return (jnp.minimum(c * steps_per_core + i, max_block), 0)

    kernel = _make_kernel(rows, tile_r, steps_per_core, needs_mask)

    in_bytes = (yhat2d.size * yhat2d.dtype.itemsize
                + y2d.size * y2d.dtype.itemsize)
    out_bytes = 2 * NCORES * SUBLANES * LANES * 4
    cost = pl.CostEstimate(
        flops=10 * n,
        transcendentals=2 * n,          # exp + log1p per element
        bytes_accessed=in_bytes + out_bytes,
    )

    sum_out, cnt_out = pl.pallas_call(
        kernel,
        out_shape=(
            jax.ShapeDtypeStruct((NCORES, SUBLANES, LANES), jnp.float32),
            jax.ShapeDtypeStruct((NCORES, SUBLANES, LANES), jnp.float32),
        ),
        grid_spec=pltpu.PrefetchScalarGridSpec(
            num_scalar_prefetch=0,
            grid=(NCORES, steps_per_core),
            in_specs=[
                pl.BlockSpec((tile_r, LANES), in_idx),
                pl.BlockSpec((tile_r, LANES), in_idx),
            ],
            out_specs=(
                pl.BlockSpec((None, SUBLANES, LANES), lambda c, i: (c, 0, 0)),
                pl.BlockSpec((None, SUBLANES, LANES), lambda c, i: (c, 0, 0)),
            ),
            scratch_shapes=[
                pltpu.VMEM((SUBLANES, LANES), jnp.float32),   # per-core loss sums
                pltpu.VMEM((SUBLANES, LANES), jnp.float32),   # per-core valid counts
            ],
        ),
        compiler_params=pltpu.CompilerParams(
            dimension_semantics=("parallel", "arbitrary"),
            vmem_limit_bytes=VMEM_LIMIT_BYTES,
        ),
        cost_estimate=cost,
    )(yhat2d, y2d)

    total = jnp.sum(sum_out) + tail_sum
    count = jnp.sum(cnt_out) + tail_cnt
    # NOTE: all-invalid input yields 0/0 = NaN, matching the PyTorch module.
    return total / count


def _reference_loss(yhat, y):
    yhat = yhat.reshape(-1).astype(jnp.float32)
    y = y.reshape(-1).astype(jnp.float32)
    t = (y + 1.0) / 2.0
    loss = jnp.maximum(yhat, 0.0) - yhat * t + jnp.log1p(jnp.exp(-jnp.abs(yhat)))
    isvalid = y != 0.0
    loss = jnp.where(isvalid, loss, 0.0)
    return jnp.sum(loss) / jnp.sum(isvalid.astype(jnp.float32))


if __name__ == "__main__":
    key = jax.random.PRNGKey(0)
    k1, k2, k3, k4 = jax.random.split(key, 4)

    # small NCHW-like input: batch=2, channels=4, spatial=16x16 -> 2048 elements
    shape = (2, 4, 16, 16)
    yhat = jax.random.normal(k1, shape, dtype=jnp.float32)
    # labels in {-1, 0, +1}; 0 means "invalid" (masked out)
    y = (jax.random.randint(k2, shape, 0, 3) - 1).astype(jnp.float32)

    batch = {"tox21/pred": yhat, "tox21/true": y}

    out = multi_classification_loss(batch["tox21/pred"], batch["tox21/true"])
    out = jax.block_until_ready(out)
    ref = _reference_loss(yhat, y)
    assert jnp.allclose(out, ref, rtol=1e-5, atol=1e-5), (out, ref)

    # Ragged size (n % 128 != 0) exercises the no-pad tail combine path.
    n_ragged = 2050
    yhat_r = jax.random.normal(k3, (n_ragged,), dtype=jnp.float32)
    y_r = (jax.random.randint(k4, (n_ragged,), 0, 3) - 1).astype(jnp.float32)
    out_r = jax.block_until_ready(multi_classification_loss(yhat_r, y_r))
    ref_r = _reference_loss(yhat_r, y_r)
    assert jnp.allclose(out_r, ref_r, rtol=1e-5, atol=1e-5), (out_r, ref_r)

    print("KERNEL_OK")
</pallas_src>

<mosaic_0001>
module attributes {stable_mosaic.version = 11 : i64} {
  func.func @kernel(%arg0: i32, %arg1: i32, %arg2: memref<8x128xf32, #tpu.memory_space<vmem>>, %arg3: memref<8x128xf32, #tpu.memory_space<vmem>>, %arg4: memref<1x8x128xf32, #tpu.memory_space<vmem>>, %arg5: memref<1x8x128xf32, #tpu.memory_space<vmem>>, %arg6: memref<8x128xf32, #tpu.memory_space<vmem>>, %arg7: memref<8x128xf32, #tpu.memory_space<vmem>>) attributes {dimension_semantics = [#tpu.dimension_semantics<parallel>, #tpu.dimension_semantics<arbitrary>], iteration_bounds = array<i64: 2, 1>, scalar_prefetch = 0 : i64, scratch_operands = 2 : i64, tpu.core_type = #tpu.core_type<tc>, window_params = [{transform_indices = @transform_0, window_bounds = array<i64: 8, 128>}, {transform_indices = @transform_1, window_bounds = array<i64: 8, 128>}, {transform_indices = @transform_2, window_bounds = array<i64: 1, 8, 128>}, {transform_indices = @transform_3, window_bounds = array<i64: 1, 8, 128>}]} {
    %c0_i32 = arith.constant 0 : i32
    %0 = arith.cmpi eq, %arg1, %c0_i32 : i32
    %1 = arith.extui %0 : i1 to i32
    %c0_i32_0 = arith.constant 0 : i32
    %2 = arith.cmpi ne, %1, %c0_i32_0 : i32
    scf.if %2 {
      %cst_21 = arith.constant 0.000000e+00 : f32
      %38 = vector.broadcast %cst_21 : f32 to vector<8x128xf32>
      %c0_22 = arith.constant 0 : index
      %c0_23 = arith.constant 0 : index
      %39 = vector.load %arg6[%c0_22, %c0_23] : memref<8x128xf32, #tpu.memory_space<vmem>>, vector<8x128xf32>
      tpu.vector_store %arg6[%c0_22, %c0_23], %38 {strides = array<i32>} : memref<8x128xf32, #tpu.memory_space<vmem>>, vector<8x128xf32>,
      %cst_24 = arith.constant 0.000000e+00 : f32
      %40 = vector.broadcast %cst_24 : f32 to vector<8x128xf32>
      %c0_25 = arith.constant 0 : index
      %c0_26 = arith.constant 0 : index
      %41 = vector.load %arg7[%c0_25, %c0_26] : memref<8x128xf32, #tpu.memory_space<vmem>>, vector<8x128xf32>
      tpu.vector_store %arg7[%c0_25, %c0_26], %40 {strides = array<i32>} : memref<8x128xf32, #tpu.memory_space<vmem>>, vector<8x128xf32>,
    } else {
    }
    %c0 = arith.constant 0 : index
    %c0_1 = arith.constant 0 : index
    %3 = vector.load %arg2[%c0, %c0_1] : memref<8x128xf32, #tpu.memory_space<vmem>>, vector<8x128xf32>
    %c0_2 = arith.constant 0 : index
    %c0_3 = arith.constant 0 : index
    %4 = vector.load %arg3[%c0_2, %c0_3] : memref<8x128xf32, #tpu.memory_space<vmem>>, vector<8x128xf32>
    %cst = arith.constant 1.000000e+00 : f32
    %5 = vector.broadcast %cst : f32 to vector<8x128xf32>
    %6 = arith.addf %4, %5 : vector<8x128xf32>
    %cst_4 = arith.constant 5.000000e-01 : f32
    %7 = vector.broadcast %cst_4 : f32 to vector<8x128xf32>
    %8 = arith.mulf %6, %7 : vector<8x128xf32>
    %cst_5 = arith.constant 0.000000e+00 : f32
    %9 = vector.broadcast %cst_5 : f32 to vector<8x128xf32>
    %10 = arith.maximumf %3, %9 : vector<8x128xf32>
    %11 = arith.mulf %3, %8 : vector<8x128xf32>
    %12 = arith.subf %10, %11 : vector<8x128xf32>
    %13 = math.absf %3 : vector<8x128xf32>
    %cst_6 = arith.constant 0.000000e+00 : f32
    %14 = vector.broadcast %cst_6 : f32 to vector<8x128xf32>
    %15 = arith.subf %14, %13 : vector<8x128xf32>
    %16 = math.exp %15 : vector<8x128xf32>
    %17 = math.log1p %16 : vector<8x128xf32>
    %18 = arith.addf %12, %17 : vector<8x128xf32>
    %cst_7 = arith.constant 0.000000e+00 : f32
    %19 = vector.broadcast %cst_7 : f32 to vector<8x128xf32>
    %20 = arith.cmpf one, %4, %19 : vector<8x128xf32>
    %cst_8 = arith.constant 0.000000e+00 : f32
    %21 = vector.broadcast %cst_8 : f32 to vector<8x128xf32>
    %22 = arith.select %20, %18, %21 : vector<8x128xi1>, vector<8x128xf32>
    %23 = arith.extui %20 : vector<8x128xi1> to vector<8x128xi32>
    %24 = arith.sitofp %23 : vector<8x128xi32> to vector<8x128xf32>
    %c0_9 = arith.constant 0 : index
    %c0_10 = arith.constant 0 : index
    %25 = vector.load %arg6[%c0_9, %c0_10] : memref<8x128xf32, #tpu.memory_space<vmem>>, vector<8x128xf32>
    %26 = vector.shape_cast %22 : vector<8x128xf32> to vector<1x8x128xf32>
    %cst_11 = arith.constant dense<0.000000e+00> : vector<8x128xf32>
    %27 = vector.multi_reduction <add>, %26, %cst_11 [0] : vector<1x8x128xf32> to vector<8x128xf32>
    %28 = arith.addf %25, %27 : vector<8x128xf32>
    %c0_12 = arith.constant 0 : index
    %c0_13 = arith.constant 0 : index
    %29 = vector.load %arg6[%c0_12, %c0_13] : memref<8x128xf32, #tpu.memory_space<vmem>>, vector<8x128xf32>
    tpu.vector_store %arg6[%c0_12, %c0_13], %28 {strides = array<i32>} : memref<8x128xf32, #tpu.memory_space<vmem>>, vector<8x128xf32>,
    %c0_14 = arith.constant 0 : index
    %c0_15 = arith.constant 0 : index
    %30 = vector.load %arg7[%c0_14, %c0_15] : memref<8x128xf32, #tpu.memory_space<vmem>>, vector<8x128xf32>
    %31 = vector.shape_cast %24 : vector<8x128xf32> to vector<1x8x128xf32>
    %cst_16 = arith.constant dense<0.000000e+00> : vector<8x128xf32>
    %32 = vector.multi_reduction <add>, %31, %cst_16 [0] : vector<1x8x128xf32> to vector<8x128xf32>
    %33 = arith.addf %30, %32 : vector<8x128xf32>
    %c0_17 = arith.constant 0 : index
    %c0_18 = arith.constant 0 : index
    %34 = vector.load %arg7[%c0_17, %c0_18] : memref<8x128xf32, #tpu.memory_space<vmem>>, vector<8x128xf32>
    tpu.vector_store %arg7[%c0_17, %c0_18], %33 {strides = array<i32>} : memref<8x128xf32, #tpu.memory_space<vmem>>, vector<8x128xf32>,
    %c0_i32_19 = arith.constant 0 : i32
    %35 = arith.cmpi eq, %arg1, %c0_i32_19 : i32
    %36 = arith.extui %35 : i1 to i32
    %c0_i32_20 = arith.constant 0 : i32
    %37 = arith.cmpi ne, %36, %c0_i32_20 : i32
    scf.if %37 {
      %c0_21 = arith.constant 0 : index
      %c0_22 = arith.constant 0 : index
      %38 = vector.load %arg6[%c0_21, %c0_22] : memref<8x128xf32, #tpu.memory_space<vmem>>, vector<8x128xf32>
      %c0_23 = arith.constant 0 : index
      %c0_24 = arith.constant 0 : index
      %c0_25 = arith.constant 0 : index
      %39 = vector.load %arg4[%c0_23, %c0_24, %c0_25] : memref<1x8x128xf32, #tpu.memory_space<vmem>>, vector<1x8x128xf32>
      %40 = vector.shape_cast %39 : vector<1x8x128xf32> to vector<8x128xf32>
      %41 = vector.shape_cast %38 : vector<8x128xf32> to vector<1x8x128xf32>
      tpu.vector_store %arg4[%c0_23, %c0_24, %c0_25], %41 {strides = array<i32>} : memref<1x8x128xf32, #tpu.memory_space<vmem>>, vector<1x8x128xf32>,
      %c0_26 = arith.constant 0 : index
      %c0_27 = arith.constant 0 : index
      %42 = vector.load %arg7[%c0_26, %c0_27] : memref<8x128xf32, #tpu.memory_space<vmem>>, vector<8x128xf32>
      %c0_28 = arith.constant 0 : index
      %c0_29 = arith.constant 0 : index
      %c0_30 = arith.constant 0 : index
      %43 = vector.load %arg5[%c0_28, %c0_29, %c0_30] : memref<1x8x128xf32, #tpu.memory_space<vmem>>, vector<1x8x128xf32>
      %44 = vector.shape_cast %43 : vector<1x8x128xf32> to vector<8x128xf32>
      %45 = vector.shape_cast %42 : vector<8x128xf32> to vector<1x8x128xf32>
      tpu.vector_store %arg5[%c0_28, %c0_29, %c0_30], %45 {strides = array<i32>} : memref<1x8x128xf32, #tpu.memory_space<vmem>>, vector<1x8x128xf32>,
    } else {
    }
    return
  }
  func.func @transform_0(%arg0: i32, %arg1: i32) -> (i32, i32) {
    %c1_i32 = arith.constant 1 : i32
    %0 = arith.muli %arg0, %c1_i32 : i32
    %1 = arith.addi %0, %arg1 : i32
    %c1_i32_0 = arith.constant 1 : i32
    %2 = arith.minsi %1, %c1_i32_0 : i32
    %c0_i32 = arith.constant 0 : i32
    %c0_i32_1 = arith.constant 0 : i32
    return %2, %c0_i32 : i32, i32
  }
  func.func @transform_1(%arg0: i32, %arg1: i32) -> (i32, i32) {
    %c1_i32 = arith.constant 1 : i32
    %0 = arith.muli %arg0, %c1_i32 : i32
    %1 = arith.addi %0, %arg1 : i32
    %c1_i32_0 = arith.constant 1 : i32
    %2 = arith.minsi %1, %c1_i32_0 : i32
    %c0_i32 = arith.constant 0 : i32
    %c0_i32_1 = arith.constant 0 : i32
    return %2, %c0_i32 : i32, i32
  }
  func.func @transform_2(%arg0: i32, %arg1: i32) -> (i32, i32, i32) {
    %c0_i32 = arith.constant 0 : i32
    %c0_i32_0 = arith.constant 0 : i32
    %c0_i32_1 = arith.constant 0 : i32
    return %arg0, %c0_i32, %c0_i32_0 : i32, i32, i32
  }
  func.func @transform_3(%arg0: i32, %arg1: i32) -> (i32, i32, i32) {
    %c0_i32 = arith.constant 0 : i32
    %c0_i32_0 = arith.constant 0 : i32
    %c0_i32_1 = arith.constant 0 : i32
    return %arg0, %c0_i32, %c0_i32_0 : i32, i32, i32
  }
}

</mosaic_0001>

<llo_original>
// kernel: tpu_custom_call.1
$region0: #{tpu_custom_call.1}
  #allocation0 [shape = 'u32[]', space=smem, size = 0x4, offset = 0x4, fixed_abs, tag = 'smem constant byte address 0x4 - core index']
  #allocation1 [shape = 'u32[144,128]{1,0:T(1,128)}', space=vmem, size = 0x12000, scoped, tag = 'internal scratch']
  #allocation2 [shape = 'f32[8,128]{1,0:T(8,128)}', space=vmem, size = 0x1000, scoped, tag = 'scratch operand']
  #allocation3 [shape = 'f32[8,128]{1,0:T(8,128)}', space=vmem, size = 0x1000, scoped, tag = 'scratch operand']
  %s0 = inlined_call_operand.hbm [shape: f32[16,128], index: 0, kind: input, shape index: {}]
  %s1 = inlined_call_operand.hbm [shape: f32[16,128], index: 1, kind: input, shape index: {}]
  %s2 = inlined_call_operand.hbm [shape: f32[2,8,128], index: 2, kind: output, shape index: {0}]
  %s3 = inlined_call_operand.hbm [shape: f32[2,8,128], index: 3, kind: output, shape index: {1}]
  %4 = xla_tuple %s2, %s3
  %s5 = sld [smem:[#allocation0]]
  $region65: #{tpu_custom_call.1} parent=0
    _
  %s7 = ssub.s32 1, %s5
  %s8 = scalar_select 0, %s7, %s5
  $region1: #{tpu_custom_call.1} parent=0
    #allocation4 [shape = 'u8[8192]{0}', space=vmem, size = 0x2000, scoped, tag = 'input window, operand 0']
    #allocation5 [shape = 's32[2]{0}', space=sflag, size = 0x8, scoped, tag = 'scoped memory for tpu_custom_call.1']
    #allocation6 [shape = 's32[2]{0}', space=sflag, size = 0x8, scoped, tag = 'scoped memory for tpu_custom_call.1']
    #allocation7 [shape = 'u8[8192]{0}', space=vmem, size = 0x2000, scoped, tag = 'input window, operand 1']
    #allocation8 [shape = 's32[2]{0}', space=sflag, size = 0x8, scoped, tag = 'scoped memory for tpu_custom_call.1']
    #allocation9 [shape = 'u8[8192]{0}', space=vmem, size = 0x2000, scoped, tag = 'output window, operand 0']
    #allocation10 [shape = 'u8[8192]{0}', space=vmem, size = 0x2000, scoped, tag = 'output window, operand 1']
    #allocation11 [shape = 's32[2]{0}', space=sflag, size = 0x8, scoped, tag = 'scoped memory for tpu_custom_call.1']
    %9 = vsyncpa [#allocation5], 0
    %s10 = scalar_lea.sflag [#allocation5], 1
    %11 = vsyncpa %s10, 0
    %12 = vsyncpa [#allocation8], 0
    %s13 = scalar_lea.sflag [#allocation8], 1
    %14 = vsyncpa %s13, 0
    %15 = vsyncpa [#allocation6], 0
    %s16 = scalar_lea.sflag [#allocation6], 1
    %17 = vsyncpa %s16, 0
    %18 = vsyncpa [#allocation11], 0
    %s19 = scalar_lea.sflag [#allocation11], 1
    %20 = vsyncpa %s19, 0
    loop: start=0, step=1, limit=4
    $region2: #{tpu_custom_call.1} parent=1 // loop_pre_header
      _
    $region3: #{tpu_custom_call.1} parent=1 // loop_header
      %s22 = sphi 0, %s26
      %p23 = scmp.ge.s32.totalorder %s22, 4
      %s29 = sphi 0, %s41
      %s30 = sphi 0, %s37
      %s31 = sphi 0, %s29
      %s32 = sphi 0, %s30
      %s33 = sphi 0, %s31
      %s34 = sphi 0, %s32
      %s50 = sphi 0, %s52
      %s53 = sphi 0, %s50
      %s54 = sphi 0, %s53
      %s70 = sphi 0, %s54
      %s82 = sphi 0, %s84
      %s85 = sphi 0, %s82
      %s86 = sphi 0, %s85
      %s102 = sphi 0, %s86
      %s108 = sphi 0, %s110
      %s111 = sphi 0, %s108
      %s112 = sphi 0, %s111
      %s128 = sphi 0, %s112
      %s134 = sphi 0, %s136
      %s137 = sphi 0, %s134
      %s138 = sphi 0, %s137
      %s154 = sphi 0, %s138
    $region4: #{tpu_custom_call.1} parent=1 // loop_header_branch
      %25 = sbr.rel (%p23) target = $region8
    $region5: #{tpu_custom_call.1} parent=1 // loop_body
      %s27 = ssub.s32 %s22, 1
      %s28 = ssub.s32 %s22, 2
      %s35 = sadd.s32 1, %s30
      %p36 = scmp.ge.s32.totalorder %s35, 1
      %s37 = scalar_select %p36, 0, %s35
      %s38 = sadd.s32 1, %s29
      %s39 = scalar_select %p36, %s38, %s29
      %p40 = scmp.ge.s32.totalorder %s39, 2
      %s41 = scalar_select %p40, 0, %s39
      %s42 = sadd.s32 %s29, %s30
      %p43 = scmp.lt.s32.totalorder %s42, 1
      %s44 = scalar_select %p43, %s42, 1
      %s45 = sadd.s32 %s41, %s37
      %p46 = scmp.lt.s32.totalorder %s45, 1
      %s47 = scalar_select %p46, %s45, 1
      %s48 = ssub.s32 %s44, %s47
      %p49 = scmp.eq.s32.totalorder %s48, 0
      %s51 = sadd.s32 %s50, 1
      %s52 = scalar_select %p49, %s50, %s51
      %p55 = pneg %p49
      %p56 = scmp.eq.s32.totalorder %s22, 1
      %p57 = por %p55, %p56
      %p58 = scmp.ne.s32.totalorder %s50, %s53
      %p59 = scmp.eq.s32.totalorder %s22, 0
      %p60 = por %p58, %p59
      %p61 = scmp.ne.s32.totalorder %s50, %s53
      %p62 = scmp.eq.s32.totalorder %s27, 1
      %p63 = por %p61, %p62
      %p64 = scmp.ne.s32.totalorder %s53, %s54
      %p65 = scmp.eq.s32.totalorder %s27, 0
      %p66 = por %p64, %p65
      %p67 = scmp.ne.s32.totalorder %s53, %s54
      %p68 = scmp.eq.s32.totalorder %s28, 1
      %p69 = por %p67, %p68
      %p71 = scmp.ne.s32.totalorder %s54, %s70
      %p72 = scmp.eq.s32.totalorder %s28, 0
      %p73 = por %p71, %p72
      %s74 = sadd.s32 %s29, %s30
      %p75 = scmp.lt.s32.totalorder %s74, 1
      %s76 = scalar_select %p75, %s74, 1
      %s77 = sadd.s32 %s41, %s37
      %p78 = scmp.lt.s32.totalorder %s77, 1
      %s79 = scalar_select %p78, %s77, 1
      %s80 = ssub.s32 %s76, %s79
      %p81 = scmp.eq.s32.totalorder %s80, 0
      %s83 = sadd.s32 %s82, 1
      %s84 = scalar_select %p81, %s82, %s83
      %p87 = pneg %p81
      %p88 = scmp.eq.s32.totalorder %s22, 1
      %p89 = por %p87, %p88
      %p90 = scmp.ne.s32.totalorder %s82, %s85
      %p91 = scmp.eq.s32.totalorder %s22, 0
      %p92 = por %p90, %p91
      %p93 = scmp.ne.s32.totalorder %s82, %s85
      %p94 = scmp.eq.s32.totalorder %s27, 1
      %p95 = por %p93, %p94
      %p96 = scmp.ne.s32.totalorder %s85, %s86
      %p97 = scmp.eq.s32.totalorder %s27, 0
      %p98 = por %p96, %p97
      %p99 = scmp.ne.s32.totalorder %s85, %s86
      %p100 = scmp.eq.s32.totalorder %s28, 1
      %p101 = por %p99, %p100
      %p103 = scmp.ne.s32.totalorder %s86, %s102
      %p104 = scmp.eq.s32.totalorder %s28, 0
      %p105 = por %p103, %p104
      %s106 = ssub.s32 %s29, %s41
      %p107 = scmp.eq.s32.totalorder %s106, 0
      %s109 = sadd.s32 %s108, 1
      %s110 = scalar_select %p107, %s108, %s109
      %p113 = pneg %p107
      %p114 = scmp.eq.s32.totalorder %s22, 1
      %p115 = por %p113, %p114
      %p116 = scmp.ne.s32.totalorder %s108, %s111
      %p117 = scmp.eq.s32.totalorder %s22, 0
      %p118 = por %p116, %p117
      %p119 = scmp.ne.s32.totalorder %s108, %s111
      %p120 = scmp.eq.s32.totalorder %s27, 1
      %p121 = por %p119, %p120
      %p122 = scmp.ne.s32.totalorder %s111, %s112
      %p123 = scmp.eq.s32.totalorder %s27, 0
      %p124 = por %p122, %p123
      %p125 = scmp.ne.s32.totalorder %s111, %s112
      %p126 = scmp.eq.s32.totalorder %s28, 1
      %p127 = por %p125, %p126
      %p129 = scmp.ne.s32.totalorder %s112, %s128
      %p130 = scmp.eq.s32.totalorder %s28, 0
      %p131 = por %p129, %p130
      %s132 = ssub.s32 %s29, %s41
      %p133 = scmp.eq.s32.totalorder %s132, 0
      %s135 = sadd.s32 %s134, 1
      %s136 = scalar_select %p133, %s134, %s135
      %p139 = pneg %p133
      %p140 = scmp.eq.s32.totalorder %s22, 1
      %p141 = por %p139, %p140
      %p142 = scmp.ne.s32.totalorder %s134, %s137
      %p143 = scmp.eq.s32.totalorder %s22, 0
      %p144 = por %p142, %p143
      %p145 = scmp.ne.s32.totalorder %s134, %s137
      %p146 = scmp.eq.s32.totalorder %s27, 1
      %p147 = por %p145, %p146
      %p148 = scmp.ne.s32.totalorder %s137, %s138
      %p149 = scmp.eq.s32.totalorder %s27, 0
      %p150 = por %p148, %p149
      %p151 = scmp.ne.s32.totalorder %s137, %s138
      %p152 = scmp.eq.s32.totalorder %s28, 1
      %p153 = por %p151, %p152
      %p155 = scmp.ne.s32.totalorder %s138, %s154
      %p156 = scmp.eq.s32.totalorder %s28, 0
      %p157 = por %p155, %p156
      %p158 = scmp.le.s32.totalorder 1, %s22
      %p159 = scmp.lt.s32.totalorder %s22, 3
      %p160 = pnand %p158, %p159
      %p161 = pneg %p160
      // Predicated region
      $region9: #{tpu_custom_call.1} parent=5 // pred_check
        _
      $region10: #{tpu_custom_call.1} parent=5 // pred_check_branch
        %163 = sbr.rel (%p160) target = $region12
      $region11: #{tpu_custom_call.1} parent=5 // pred_region
        %s164 = ssub.s32 %s22, 1
      $region12: #{tpu_custom_call.1} parent=5 // pred_fallthru
        _
      %p165 = scmp.lt.s32.totalorder %s22, 2
      // Predicated region
      $region13: #{tpu_custom_call.1} parent=5 // pred_check
        %p166 = pneg %p165
      $region14: #{tpu_custom_call.1} parent=5 // pred_check_branch
        %168 = sbr.rel (%p166) target = $region16
      $region15: #{tpu_custom_call.1} parent=5 // pred_region
        // Predicated region
        $region17: #{tpu_custom_call.1} parent=15 // pred_check
          %p169 = pneg %p60
        $region18: #{tpu_custom_call.1} parent=15 // pred_check_branch
          %171 = sbr.rel (%p169) target = $region20
        $region19: #{tpu_custom_call.1} parent=15 // pred_region
          %s172 = sand.u32 %s50, 1
          %s173 = scalar_lea.sflag [#allocation5], %s172
          %s174 = sand.u32 %s50, 1
          %s175 = smul.addr %s174, 8
          %s176 = scalar_lea.vmem [#allocation4], %s175
          %s177 = sadd.s32 %s29, %s30
          %p178 = scmp.lt.s32.totalorder %s177, 1
          %s179 = scalar_select %p178, %s177, 1
          %s181 = ssub.s32 128, 128
          %182 = vsyncadd %s173, %s181
          %s183 = smul.addr %s179, 128
          %s184 = scalar_lea.hbm %s0, %s183
          %s186 = sshll.u32 %s176, 4
          %s187 = int_to_ptr.vmem [resolvable:$true] %s186
          %189 = dma.hbm_to_vmem [thread:$0]  %s184, 128, %s187, %s173
        $region20: #{tpu_custom_call.1} parent=15 // pred_fallthru
          _
        // Predicated region
        $region21: #{tpu_custom_call.1} parent=15 // pred_check
          %p190 = pneg %p92
        $region22: #{tpu_custom_call.1} parent=15 // pred_check_branch
          %192 = sbr.rel (%p190) target = $region24
        $region23: #{tpu_custom_call.1} parent=15 // pred_region
          %s193 = sand.u32 %s82, 1
          %s194 = scalar_lea.sflag [#allocation8], %s193
          %s195 = sand.u32 %s82, 1
          %s196 = smul.addr %s195, 8
          %s197 = scalar_lea.vmem [#allocation7], %s196
          %s198 = sadd.s32 %s29, %s30
          %p199 = scmp.lt.s32.totalorder %s198, 1
          %s200 = scalar_select %p199, %s198, 1
          %s202 = ssub.s32 128, 128
          %203 = vsyncadd %s194, %s202
          %s204 = smul.addr %s200, 128
          %s205 = scalar_lea.hbm %s1, %s204
          %s207 = sshll.u32 %s197, 4
          %s208 = int_to_ptr.vmem [resolvable:$true] %s207
          %210 = dma.hbm_to_vmem [thread:$0]  %s205, 128, %s208, %s194
        $region24: #{tpu_custom_call.1} parent=15 // pred_fallthru
          _
      $region16: #{tpu_custom_call.1} parent=5 // pred_fallthru
        _
      %p211 = scmp.le.s32.totalorder 1, %s22
      %p212 = scmp.lt.s32.totalorder %s22, 3
      %p213 = pnand %p211, %p212
      %p214 = pneg %p213
      // Predicated region
      $region25: #{tpu_custom_call.1} parent=5 // pred_check
        _
      $region26: #{tpu_custom_call.1} parent=5 // pred_check_branch
        %216 = sbr.rel (%p213) target = $region28
      $region27: #{tpu_custom_call.1} parent=5 // pred_region
        %s217 = ssub.s32 %s22, 1
        %s218 = sand.u32 %s53, 1
        %s219 = scalar_lea.sflag [#allocation5], %s218
        %s220 = sand.u32 %s53, 1
        %s221 = smul.addr %s220, 8
        %s222 = scalar_lea.vmem [#allocation4], %s221
        // Predicated region
        $region29: #{tpu_custom_call.1} parent=27 // pred_check
          %p223 = pneg %p66
        $region30: #{tpu_custom_call.1} parent=27 // pred_check_branch
          %225 = sbr.rel (%p223) target = $region32
        $region31: #{tpu_custom_call.1} parent=27 // pred_region
          %226 = dma.done %s219, 128
        $region32: #{tpu_custom_call.1} parent=27 // pred_fallthru
          _
        %s227 = sand.u32 %s85, 1
        %s228 = scalar_lea.sflag [#allocation8], %s227
        %s229 = sand.u32 %s85, 1
        %s230 = smul.addr %s229, 8
        %s231 = scalar_lea.vmem [#allocation7], %s230
        // Predicated region
        $region33: #{tpu_custom_call.1} parent=27 // pred_check
          %p232 = pneg %p98
        $region34: #{tpu_custom_call.1} parent=27 // pred_check_branch
          %234 = sbr.rel (%p232) target = $region36
        $region35: #{tpu_custom_call.1} parent=27 // pred_region
          %235 = dma.done %s228, 128
        $region36: #{tpu_custom_call.1} parent=27 // pred_fallthru
          _
        %s236 = sand.u32 %s53, 1
        %s237 = scalar_lea.sflag [#allocation5], %s236
        %s238 = sand.u32 %s53, 1
        %s239 = smul.addr %s238, 8
        %s240 = scalar_lea.vmem [#allocation4], %s239
        %p241 = pneg %p66
        %p242 = pneg %p63
        %s243 = sand.u32 %s85, 1
        %s244 = scalar_lea.sflag [#allocation8], %s243
        %s245 = sand.u32 %s85, 1
        %s246 = smul.addr %s245, 8
        %s247 = scalar_lea.vmem [#allocation7], %s246
        %p248 = pneg %p98
        %p249 = pneg %p95
        %p250 = pneg %p124
        %p251 = pneg %p121
        %s252 = sand.u32 %s111, 1
        %s253 = scalar_lea.sflag [#allocation6], %s252
        %s254 = sand.u32 %s111, 1
        %s255 = smul.addr %s254, 8
        %s256 = scalar_lea.vmem [#allocation9], %s255
        %p257 = pneg %p150
        %p258 = pneg %p147
        %s259 = sand.u32 %s137, 1
        %s260 = scalar_lea.sflag [#allocation11], %s259
        %s261 = sand.u32 %s137, 1
        %s262 = smul.addr %s261, 8
        %s263 = scalar_lea.vmem [#allocation10], %s262
        %s264 = sadd.s32 %s31, %s32
        %p265 = scmp.lt.s32.totalorder %s264, 1
        %s266 = scalar_select %p265, %s264, 1
        %s267 = sadd.s32 %s31, %s32
        %p268 = scmp.lt.s32.totalorder %s267, 1
        %s269 = scalar_select %p268, %s267, 1
        %p270 = scmp.eq.s32.totalorder %s32, 0
        // Predicated region
        $region37: #{tpu_custom_call.1} parent=27 // pred_check
          %p271 = pneg %p270
        $region38: #{tpu_custom_call.1} parent=27 // pred_check_branch
          %273 = sbr.rel (%p271) target = $region40
        $region39: #{tpu_custom_call.1} parent=27 // pred_region
          %274 = vst [vmem:[#allocation2] sm:$0xff] 0.0
          %275 = vst [vmem:[#allocation3] sm:$0xff] 0.0
        $region40: #{tpu_custom_call.1} parent=27 // pred_fallthru
          _
        %v276 = vld [vmem:[%s222] sm:$0xff]
        %v277 = vld [vmem:[%s231] sm:$0xff]
        %v278 = vadd.f32 %v277, 1.0
        %v279 = vmul.f32 %v278, 0.5
        %v280 = vmax.f32 %v276, 0.0
        %v281 = vmul.f32 %v276, %v279
        %v282 = vsub.f32 %v280, %v281
        %v283 = vand.u32 2147483647, %v276
        %v284 = vsub.f32 0.0, %v283
        %v285 = vmul.f32 %v284, 1.442695
        %v286 = vpow.pop %v285
        %v287 = vadd.f32 %v286, 1.0
        %v288 = vlog2.pop %v287
        %v289 = vmul.f32 %v288, 0.6931472
        %v290 = vmul.f32 -0.5, %v286
        %v291 = vadd.f32 %v290, 1.0
        %v292 = vmul.f32 %v291, %v286
        %v293 = vand.u32 2147483647, %v286
        %vm294 = vcmp.lt.f32.partialorder %v293, 0.0004427343
        %v295 = vsel %vm294, %v292, %v289
        %v296 = vadd.f32 %v282, %v295
        %vm297 = vcmp.ne.f32.partialorder %v277, 0.0
        %v298 = vsel %vm297, %v296, 0.0
        %v299 = vsel %vm297, 1, 0
        %v300 = vcvt.s32.f32 %v299
        %v301 = vld [vmem:[#allocation2] sm:$0xff]
        %v302 = vadd.f32 %v298, 0.0
        %v303 = vadd.f32 %v301, %v302
        %304 = vst [vmem:[#allocation2] sm:$0xff] %v303
        %v305 = vld [vmem:[#allocation3] sm:$0xff]
        %v306 = vadd.f32 %v300, 0.0
        %v307 = vadd.f32 %v305, %v306
        %308 = vst [vmem:[#allocation3] sm:$0xff] %v307
        // Predicated region
        $region41: #{tpu_custom_call.1} parent=27 // pred_check
          %p309 = pneg %p270
        $region42: #{tpu_custom_call.1} parent=27 // pred_check_branch
          %311 = sbr.rel (%p309) target = $region44
        $region43: #{tpu_custom_call.1} parent=27 // pred_region
          %v312 = vld [vmem:[#allocation2] sm:$0xff]
          %313 = vst [vmem:[%s256] sm:$0xff] %v312
          %v314 = vld [vmem:[#allocation3] sm:$0xff]
          %315 = vst [vmem:[%s263] sm:$0xff] %v314
        $region44: #{tpu_custom_call.1} parent=27 // pred_fallthru
          _
        %s316 = sand.u32 %s111, 1
        %s317 = scalar_lea.sflag [#allocation6], %s316
        %s318 = sand.u32 %s111, 1
        %s319 = smul.addr %s318, 8
        %s320 = scalar_lea.vmem [#allocation9], %s319
        %s321 = sand.u32 %s137, 1
        %s322 = scalar_lea.sflag [#allocation11], %s321
        %s323 = sand.u32 %s137, 1
        %s324 = smul.addr %s323, 8
        %s325 = scalar_lea.vmem [#allocation10], %s324
        // Predicated region
        $region45: #{tpu_custom_call.1} parent=27 // pred_check
          %p326 = pneg %p121
        $region46: #{tpu_custom_call.1} parent=27 // pred_check_branch
          %328 = sbr.rel (%p326) target = $region48
        $region47: #{tpu_custom_call.1} parent=27 // pred_region
          %s330 = ssub.s32 128, 128
          %331 = vsyncadd %s317, %s330
          %s332 = smul.addr %s31, 128
          %s333 = scalar_lea.hbm %s2, %s332
          %s335 = sshll.u32 %s320, 4
          %s336 = int_to_ptr.vmem [resolvable:$true] %s335
          %338 = dma.vmem_to_hbm [thread:$0]  %s336, 128, %s333, %s317
        $region48: #{tpu_custom_call.1} parent=27 // pred_fallthru
          _
        // Predicated region
        $region49: #{tpu_custom_call.1} parent=27 // pred_check
          %p339 = pneg %p147
        $region50: #{tpu_custom_call.1} parent=27 // pred_check_branch
          %341 = sbr.rel (%p339) target = $region52
        $region51: #{tpu_custom_call.1} parent=27 // pred_region
          %s343 = ssub.s32 128, 128
          %344 = vsyncadd %s322, %s343
          %s345 = smul.addr %s31, 128
          %s346 = scalar_lea.hbm %s3, %s345
          %s348 = sshll.u32 %s325, 4
          %s349 = int_to_ptr.vmem [resolvable:$true] %s348
          %351 = dma.vmem_to_hbm [thread:$0]  %s349, 128, %s346, %s322
        $region52: #{tpu_custom_call.1} parent=27 // pred_fallthru
          _
      $region28: #{tpu_custom_call.1} parent=5 // pred_fallthru
        _
      %p352 = scmp.le.s32.totalorder 2, %s22
      // Predicated region
      $region53: #{tpu_custom_call.1} parent=5 // pred_check
        %p353 = pneg %p352
      $region54: #{tpu_custom_call.1} parent=5 // pred_check_branch
        %355 = sbr.rel (%p353) target = $region56
      $region55: #{tpu_custom_call.1} parent=5 // pred_region
        %s356 = ssub.s32 %s22, 2
        // Predicated region
        $region57: #{tpu_custom_call.1} parent=55 // pred_check
          %p357 = pneg %p127
        $region58: #{tpu_custom_call.1} parent=55 // pred_check_branch
          %359 = sbr.rel (%p357) target = $region60
        $region59: #{tpu_custom_call.1} parent=55 // pred_region
          %s360 = sand.u32 %s112, 1
          %s361 = scalar_lea.sflag [#allocation6], %s360
          %s362 = sand.u32 %s112, 1
          %s363 = smul.addr %s362, 8
          %s364 = scalar_lea.vmem [#allocation9], %s363
          %365 = dma.done %s361, 128
        $region60: #{tpu_custom_call.1} parent=55 // pred_fallthru
          _
        // Predicated region
        $region61: #{tpu_custom_call.1} parent=55 // pred_check
          %p366 = pneg %p153
        $region62: #{tpu_custom_call.1} parent=55 // pred_check_branch
          %368 = sbr.rel (%p366) target = $region64
        $region63: #{tpu_custom_call.1} parent=55 // pred_region
          %s369 = sand.u32 %s138, 1
          %s370 = scalar_lea.sflag [#allocation11], %s369
          %s371 = sand.u32 %s138, 1
          %s372 = smul.addr %s371, 8
          %s373 = scalar_lea.vmem [#allocation10], %s372
          %374 = dma.done %s370, 128
        $region64: #{tpu_custom_call.1} parent=55 // pred_fallthru
          _
      $region56: #{tpu_custom_call.1} parent=5 // pred_fallthru
        _
    $region6: #{tpu_custom_call.1} parent=1 // loop_footer
      %s26 = sadd.s32 1, %s22
    $region7: #{tpu_custom_call.1} parent=1 // loop_footer_branch
      %21 = sbr.rel target = $region3
    $region8: #{tpu_custom_call.1} parent=1 // loop_exit
      _
    %375 = vsyncpa [#allocation5], 1
    %s376 = scalar_lea.sflag [#allocation5], 1
    %377 = vsyncpa %s376, 1
    %378 = vsyncpa [#allocation8], 1
    %s379 = scalar_lea.sflag [#allocation8], 1
    %380 = vsyncpa %s379, 1
    %381 = vsyncpa [#allocation6], 1
    %s382 = scalar_lea.sflag [#allocation6], 1
    %383 = vsyncpa %s382, 1
    %384 = vsyncpa [#allocation11], 1
    %s385 = scalar_lea.sflag [#allocation11], 1
    %386 = vsyncpa %s385, 1

</llo_original>
